<compile_context>
chip_gen: v6e
topology: v6e:2x2x1
jax: 0.10.0
libtpu: 0.0.40
codegen_flags: <defaults>
</compile_context>

<pallas_src>
import functools

import jax
import jax.numpy as jnp
from jax import lax
from jax.experimental import pallas as pl
from jax.experimental.pallas import tpu as pltpu


def _round_up(x, m):
    return (x + m - 1) // m * m


def _warp_kernel(src_ref, locs_ref, out_ref, *, C, H, W):
    """One (batch, output-tile) step.

    src_ref  : (1, C*H, W)    full source image, rows = (channel, row) pairs
    locs_ref : (1, 2, TILE_N) absolute sample coords for this output tile
               channel 0 = row coordinate, channel 1 = col coordinate
    out_ref  : (1, C, TILE_N) warped output tile
    """
    f32 = jnp.float32
    TILE_N = out_ref.shape[-1]

    # align_corners=True: the normalize -> grid_sample denormalize round trip
    # is the identity; padding_mode='border' == clamp of the coordinate.
    y = jnp.clip(locs_ref[0, 0:1, :], 0.0, float(H - 1))   # (1, TILE_N)
    x = jnp.clip(locs_ref[0, 1:2, :], 0.0, float(W - 1))   # (1, TILE_N)

    y0f = jnp.floor(y)
    x0f = jnp.floor(x)
    wy = y - y0f
    wx = x - x0f
    y0 = y0f.astype(jnp.int32)
    x0 = x0f.astype(jnp.int32)
    y1 = jnp.minimum(y0 + 1, H - 1)
    x1 = jnp.minimum(x0 + 1, W - 1)

    # Separable bilinear factors: O((H + W) * TILE_N) compare/mul work.
    r = lax.broadcasted_iota(jnp.int32, (H, TILE_N), 0)     # input row ids
    c = lax.broadcasted_iota(jnp.int32, (W, TILE_N), 0)     # input col ids
    Ry = (r == y0).astype(f32) * (1.0 - wy) + (r == y1).astype(f32) * wy
    Cx = (c == x0).astype(f32) * (1.0 - wx) + (c == x1).astype(f32) * wx

    # Stage 1 (MXU): contract the column axis.  M = C*H, K = W, N = TILE_N.
    Z = jnp.dot(src_ref[0], Cx, preferred_element_type=jnp.float32)  # (C*H, TILE_N)

    # Stage 2 (VPU mul + XLU sublane reduce): contract the row axis.
    out = jnp.sum(Z.reshape(C, H, TILE_N) * Ry[None, :, :], axis=1)  # (C, TILE_N)
    out_ref[0] = out.astype(out_ref.dtype)


def transformer_2d(src, flow, *, tile_n=1024):
    """src: (B, C, H, W) f32, flow: (B, 2, H, W) f32 -> (B, C, H, W)."""
    B, C, H, W = src.shape
    assert flow.shape == (B, 2, H, W)
    HW = H * W

    # Lane-dense tile of the output-pixel axis (multiple of 128).
    TILE_N = _round_up(min(tile_n, _round_up(HW, 128)), 128)
    HW_pad = _round_up(HW, TILE_N)
    num_tiles = HW_pad // TILE_N

    # Absolute sample coordinates (the module's `new_locs` pre-normalization):
    # channel 0 = row index + flow[:,0], channel 1 = col index + flow[:,1].
    iy = jnp.arange(H, dtype=src.dtype)[None, :, None]
    jx = jnp.arange(W, dtype=src.dtype)[None, None, :]
    locs = jnp.stack([flow[:, 0] + iy, flow[:, 1] + jx], axis=1).reshape(B, 2, HW)
    if HW_pad != HW:
        # Padded pixels are computed (coords clamp to (0,0)) and sliced off.
        locs = jnp.pad(locs, ((0, 0), (0, 0), (0, HW_pad - HW)))

    # (B, C*H, W): W stays the lane dim, so stage 1 needs no in-kernel
    # split/merge of the lane axis; src block index is constant over tiles.
    src_f = src.reshape(B, C * H, W)

    kernel = functools.partial(_warp_kernel, C=C, H=H, W=W)

    # Per-step VMEM footprint: double-buffered blocks + live intermediates.
    step_bytes = 4 * (
        2 * C * H * W              # src block x 2 buffers
        + 2 * 2 * TILE_N           # locs block x 2 buffers
        + 2 * C * TILE_N           # out block x 2 buffers
        + 3 * (H + W) * TILE_N     # iotas + Ry/Cx factors
        + 2 * C * H * TILE_N       # Z and the Ry-weighted product
    )
    try:
        vmem_cap = pltpu.get_tpu_info().vmem_capacity_bytes
    except Exception:
        vmem_cap = 64 * 1024 * 1024  # v7x per-TC floor
    vmem_limit = int(min(max(step_bytes + (4 << 20), 32 << 20),
                         int(0.75 * vmem_cap)))

    flops = int(2 * B * (C * H) * W * HW_pad + 2 * B * C * H * HW_pad)
    bytes_accessed = int(4 * (B * C * HW + 2 * B * HW_pad + B * C * HW_pad))

    out = pl.pallas_call(
        kernel,
        out_shape=jax.ShapeDtypeStruct((B, C, HW_pad), src.dtype),
        grid_spec=pltpu.PrefetchScalarGridSpec(
            num_scalar_prefetch=0,
            grid=(B, num_tiles),
            in_specs=[
                # Full source per batch element; block index constant across
                # the tile axis so it is fetched once per batch.
                pl.BlockSpec((1, C * H, W), lambda b, n: (b, 0, 0)),
                pl.BlockSpec((1, 2, TILE_N), lambda b, n: (b, 0, n)),
            ],
            out_specs=pl.BlockSpec((1, C, TILE_N), lambda b, n: (b, 0, n)),
        ),
        compiler_params=pltpu.CompilerParams(
            dimension_semantics=("parallel", "parallel"),
            vmem_limit_bytes=vmem_limit,
        ),
        cost_estimate=pl.CostEstimate(
            flops=flops, transcendentals=0, bytes_accessed=bytes_accessed),
    )(src_f, locs)

    return out[:, :, :HW].reshape(B, C, H, W)


def ref_transformer_2d(src, flow):
    """Pure-JAX reference (same semantics as the PyTorch module)."""
    B, C, H, W = src.shape
    ii = jnp.arange(H, dtype=jnp.float32)[None, :, None]
    jj = jnp.arange(W, dtype=jnp.float32)[None, None, :]
    y = jnp.clip(ii + flow[:, 0], 0.0, H - 1)
    x = jnp.clip(jj + flow[:, 1], 0.0, W - 1)
    y0 = jnp.floor(y)
    x0 = jnp.floor(x)
    wy = y - y0
    wx = x - x0
    y0i = y0.astype(jnp.int32)
    x0i = x0.astype(jnp.int32)
    y1i = jnp.minimum(y0i + 1, H - 1)
    x1i = jnp.minimum(x0i + 1, W - 1)
    s = jnp.transpose(src, (0, 2, 3, 1))           # (B, H, W, C)
    bidx = jnp.arange(B)[:, None, None]

    def g(yi, xi):
        return s[bidx, yi, xi]                      # (B, H, W, C)

    out = (g(y0i, x0i) * ((1 - wy) * (1 - wx))[..., None]
           + g(y0i, x1i) * ((1 - wy) * wx)[..., None]
           + g(y1i, x0i) * (wy * (1 - wx))[..., None]
           + g(y1i, x1i) * (wy * wx)[..., None])
    return jnp.transpose(out, (0, 3, 1, 2))


if __name__ == "__main__":
    key = jax.random.PRNGKey(0)
    k1, k2 = jax.random.split(key)
    B, C, H, W = 2, 4, 16, 16

    src = jax.random.normal(k1, (B, C, H, W), dtype=jnp.float32)
    flow = jax.random.uniform(
        k2, (B, 2, H, W), dtype=jnp.float32, minval=-3.0, maxval=3.0
    )

    out = transformer_2d(src, flow)
    jax.block_until_ready(out)

    ref = ref_transformer_2d(src, flow)
    assert out.shape == (B, C, H, W)
    assert jnp.allclose(out, ref, atol=1e-5, rtol=1e-5)

    print("KERNEL_OK")
</pallas_src>

<mosaic_0001>
module attributes {stable_mosaic.version = 11 : i64} {
  func.func @_warp_kernel(%arg0: i32, %arg1: i32, %arg2: memref<1x64x16xf32, #tpu.memory_space<vmem>>, %arg3: memref<1x2x256xf32, #tpu.memory_space<vmem>>, %arg4: memref<1x4x256xf32, #tpu.memory_space<vmem>>) attributes {dimension_semantics = [#tpu.dimension_semantics<parallel>, #tpu.dimension_semantics<parallel>], iteration_bounds = array<i64: 2, 1>, scalar_prefetch = 0 : i64, scratch_operands = 0 : i64, tpu.core_type = #tpu.core_type<tc>, window_params = [{transform_indices = @transform_0, window_bounds = array<i64: 1, 64, 16>}, {transform_indices = @transform_1, window_bounds = array<i64: 1, 2, 256>}, {transform_indices = @transform_2, window_bounds = array<i64: 1, 4, 256>}]} {
    %c0 = arith.constant 0 : index
    %c0_0 = arith.constant 0 : index
    %c0_1 = arith.constant 0 : index
    %0 = vector.load %arg3[%c0, %c0_0, %c0_1] : memref<1x2x256xf32, #tpu.memory_space<vmem>>, vector<1x1x256xf32>
    %1 = vector.shape_cast %0 : vector<1x1x256xf32> to vector<1x256xf32>
    %cst = arith.constant 0.000000e+00 : f32
    %cst_2 = arith.constant 1.500000e+01 : f32
    %2 = vector.broadcast %cst : f32 to vector<1x256xf32>
    %3 = arith.maximumf %2, %1 : vector<1x256xf32>
    %4 = vector.broadcast %cst_2 : f32 to vector<1x256xf32>
    %5 = arith.minimumf %4, %3 : vector<1x256xf32>
    %c0_3 = arith.constant 0 : index
    %c1 = arith.constant 1 : index
    %c0_4 = arith.constant 0 : index
    %6 = vector.load %arg3[%c0_3, %c1, %c0_4] : memref<1x2x256xf32, #tpu.memory_space<vmem>>, vector<1x1x256xf32>
    %7 = vector.shape_cast %6 : vector<1x1x256xf32> to vector<1x256xf32>
    %cst_5 = arith.constant 0.000000e+00 : f32
    %cst_6 = arith.constant 1.500000e+01 : f32
    %8 = vector.broadcast %cst_5 : f32 to vector<1x256xf32>
    %9 = arith.maximumf %8, %7 : vector<1x256xf32>
    %10 = vector.broadcast %cst_6 : f32 to vector<1x256xf32>
    %11 = arith.minimumf %10, %9 : vector<1x256xf32>
    %12 = math.floor %5 : vector<1x256xf32>
    %13 = math.floor %11 : vector<1x256xf32>
    %14 = arith.subf %5, %12 : vector<1x256xf32>
    %15 = arith.subf %11, %13 : vector<1x256xf32>
    %16 = arith.fptosi %12 : vector<1x256xf32> to vector<1x256xi32>
    %17 = arith.fptosi %13 : vector<1x256xf32> to vector<1x256xi32>
    %c1_i32 = arith.constant 1 : i32
    %18 = vector.broadcast %c1_i32 : i32 to vector<1x256xi32>
    %19 = arith.addi %16, %18 : vector<1x256xi32>
    %c15_i32 = arith.constant 15 : i32
    %20 = vector.broadcast %c15_i32 : i32 to vector<1x256xi32>
    %21 = arith.minsi %19, %20 : vector<1x256xi32>
    %c1_i32_7 = arith.constant 1 : i32
    %22 = vector.broadcast %c1_i32_7 : i32 to vector<1x256xi32>
    %23 = arith.addi %17, %22 : vector<1x256xi32>
    %c15_i32_8 = arith.constant 15 : i32
    %24 = vector.broadcast %c15_i32_8 : i32 to vector<1x256xi32>
    %25 = arith.minsi %23, %24 : vector<1x256xi32>
    %26 = tpu.iota {dimensions = array<i32: 0>} : vector<16x256xi32>
    %27 = tpu.iota {dimensions = array<i32: 0>} : vector<16x256xi32>
    %28 = vector.broadcast %16 : vector<1x256xi32> to vector<16x256xi32>
    %29 = arith.cmpi eq, %26, %28 : vector<16x256xi32>
    %30 = arith.extui %29 : vector<16x256xi1> to vector<16x256xi32>
    %31 = arith.sitofp %30 : vector<16x256xi32> to vector<16x256xf32>
    %cst_9 = arith.constant 1.000000e+00 : f32
    %32 = vector.broadcast %cst_9 : f32 to vector<1x256xf32>
    %33 = arith.subf %32, %14 : vector<1x256xf32>
    %34 = vector.broadcast %33 : vector<1x256xf32> to vector<16x256xf32>
    %35 = arith.mulf %31, %34 : vector<16x256xf32>
    %36 = vector.broadcast %21 : vector<1x256xi32> to vector<16x256xi32>
    %37 = arith.cmpi eq, %26, %36 : vector<16x256xi32>
    %38 = arith.extui %37 : vector<16x256xi1> to vector<16x256xi32>
    %39 = arith.sitofp %38 : vector<16x256xi32> to vector<16x256xf32>
    %40 = vector.broadcast %14 : vector<1x256xf32> to vector<16x256xf32>
    %41 = arith.mulf %39, %40 : vector<16x256xf32>
    %42 = arith.addf %35, %41 : vector<16x256xf32>
    %43 = vector.broadcast %17 : vector<1x256xi32> to vector<16x256xi32>
    %44 = arith.cmpi eq, %27, %43 : vector<16x256xi32>
    %45 = arith.extui %44 : vector<16x256xi1> to vector<16x256xi32>
    %46 = arith.sitofp %45 : vector<16x256xi32> to vector<16x256xf32>
    %cst_10 = arith.constant 1.000000e+00 : f32
    %47 = vector.broadcast %cst_10 : f32 to vector<1x256xf32>
    %48 = arith.subf %47, %15 : vector<1x256xf32>
    %49 = vector.broadcast %48 : vector<1x256xf32> to vector<16x256xf32>
    %50 = arith.mulf %46, %49 : vector<16x256xf32>
    %51 = vector.broadcast %25 : vector<1x256xi32> to vector<16x256xi32>
    %52 = arith.cmpi eq, %27, %51 : vector<16x256xi32>
    %53 = arith.extui %52 : vector<16x256xi1> to vector<16x256xi32>
    %54 = arith.sitofp %53 : vector<16x256xi32> to vector<16x256xf32>
    %55 = vector.broadcast %15 : vector<1x256xf32> to vector<16x256xf32>
    %56 = arith.mulf %54, %55 : vector<16x256xf32>
    %57 = arith.addf %50, %56 : vector<16x256xf32>
    %c0_11 = arith.constant 0 : index
    %c0_12 = arith.constant 0 : index
    %c0_13 = arith.constant 0 : index
    %58 = vector.load %arg2[%c0_11, %c0_12, %c0_13] : memref<1x64x16xf32, #tpu.memory_space<vmem>>, vector<1x64x16xf32>
    %59 = vector.shape_cast %58 : vector<1x64x16xf32> to vector<64x16xf32>
    %cst_14 = arith.constant dense<0.000000e+00> : vector<64x256xf32>
    %60 = tpu.matmul %59, %57, %cst_14 {dimension_numbers = #tpu.dot_dimension_numbers<[1], [0], [0], [1], [0, 0, 1, 1], [], []>} : vector<64x16xf32>, vector<16x256xf32>, vector<64x256xf32> -> vector<64x256xf32>
    %61 = vector.shape_cast %60 : vector<64x256xf32> to vector<4x16x256xf32>
    %62 = vector.shape_cast %42 : vector<16x256xf32> to vector<1x16x256xf32>
    %63 = vector.broadcast %62 : vector<1x16x256xf32> to vector<4x16x256xf32>
    %64 = arith.mulf %61, %63 : vector<4x16x256xf32>
    %cst_15 = arith.constant dense<0.000000e+00> : vector<4x256xf32>
    %65 = vector.multi_reduction <add>, %64, %cst_15 [1] : vector<4x16x256xf32> to vector<4x256xf32>
    %c0_16 = arith.constant 0 : index
    %c0_17 = arith.constant 0 : index
    %c0_18 = arith.constant 0 : index
    %66 = vector.load %arg4[%c0_16, %c0_17, %c0_18] : memref<1x4x256xf32, #tpu.memory_space<vmem>>, vector<1x4x256xf32>
    %67 = vector.shape_cast %66 : vector<1x4x256xf32> to vector<4x256xf32>
    %68 = vector.shape_cast %65 : vector<4x256xf32> to vector<1x4x256xf32>
    tpu.vector_store %arg4[%c0_16, %c0_17, %c0_18], %68 {strides = array<i32>} : memref<1x4x256xf32, #tpu.memory_space<vmem>>, vector<1x4x256xf32>,
    return
  }
  func.func @transform_0(%arg0: i32, %arg1: i32) -> (i32, i32, i32) {
    %c0_i32 = arith.constant 0 : i32
    %c0_i32_0 = arith.constant 0 : i32
    %c0_i32_1 = arith.constant 0 : i32
    return %arg0, %c0_i32, %c0_i32_0 : i32, i32, i32
  }
  func.func @transform_1(%arg0: i32, %arg1: i32) -> (i32, i32, i32) {
    %c0_i32 = arith.constant 0 : i32
    %c0_i32_0 = arith.constant 0 : i32
    return %arg0, %c0_i32, %arg1 : i32, i32, i32
  }
  func.func @transform_2(%arg0: i32, %arg1: i32) -> (i32, i32, i32) {
    %c0_i32 = arith.constant 0 : i32
    %c0_i32_0 = arith.constant 0 : i32
    return %arg0, %c0_i32, %arg1 : i32, i32, i32
  }
}

</mosaic_0001>

<llo_original>
// kernel: tpu_custom_call.1
$region0: #{tpu_custom_call.1}
  #allocation0 [shape = 'u32[]', space=smem, size = 0x4, offset = 0x4, fixed_abs, tag = 'smem constant byte address 0x4 - core index']
  #allocation1 [shape = 'u32[144,128]{1,0:T(1,128)}', space=vmem, size = 0x12000, scoped, tag = 'internal scratch']
  %s0 = inlined_call_operand.vmem [shape: f32[2,64,16], index: 0, kind: input, shape index: {}]
  %s1 = inlined_call_operand.vmem [shape: f32[2,2,256], index: 1, kind: input, shape index: {}]
  %s2 = inlined_call_operand.hbm [shape: f32[2,4,256], index: 2, kind: output, shape index: {}]
  %s3 = sld [smem:[#allocation0]]
  $region41: #{tpu_custom_call.1} parent=0
    _
  %s5 = ssub.s32 1, %s3
  %s6 = scalar_select 0, %s5, %s3
  $region1: #{tpu_custom_call.1} parent=0
    #allocation2 [shape = 'u8[8192]{0}', space=vmem, size = 0x2000, scoped, tag = 'output window, operand 0']
    #allocation3 [shape = 's32[2]{0}', space=sflag, size = 0x8, scoped, tag = 'scoped memory for tpu_custom_call.1']
    %7 = vsyncpa [#allocation3], 0
    %s8 = scalar_lea.sflag [#allocation3], 1
    %9 = vsyncpa %s8, 0
    loop: start=0, step=1, limit=4
    $region2: #{tpu_custom_call.1} parent=1 // loop_pre_header
      _
    $region3: #{tpu_custom_call.1} parent=1 // loop_header
      %s11 = sphi 0, %s15
      %p12 = scmp.ge.s32.totalorder %s11, 4
      %s18 = sphi 0, %s30
      %s19 = sphi 0, %s26
      %s20 = sphi 0, %s18
      %s21 = sphi 0, %s19
      %s22 = sphi 0, %s20
      %s23 = sphi 0, %s21
      %s33 = sphi 0, %s35
      %s36 = sphi 0, %s33
      %s37 = sphi 0, %s36
      %s53 = sphi 0, %s37
      %s61 = sphi 0, %s63
      %s64 = sphi 0, %s61
      %s65 = sphi 0, %s64
      %s81 = sphi 0, %s65
      %s89 = sphi 0, %s91
      %s92 = sphi 0, %s89
      %s93 = sphi 0, %s92
      %s109 = sphi 0, %s93
    $region4: #{tpu_custom_call.1} parent=1 // loop_header_branch
      %14 = sbr.rel (%p12) target = $region8
    $region5: #{tpu_custom_call.1} parent=1 // loop_body
      %s16 = ssub.s32 %s11, 1
      %s17 = ssub.s32 %s11, 2
      %s24 = sadd.s32 1, %s19
      %p25 = scmp.ge.s32.totalorder %s24, 1
      %s26 = scalar_select %p25, 0, %s24
      %s27 = sadd.s32 1, %s18
      %s28 = scalar_select %p25, %s27, %s18
      %p29 = scmp.ge.s32.totalorder %s28, 2
      %s30 = scalar_select %p29, 0, %s28
      %s31 = ssub.s32 %s18, %s30
      %p32 = scmp.eq.s32.totalorder %s31, 0
      %s34 = sadd.s32 %s33, 1
      %s35 = scalar_select %p32, %s33, %s34
      %p38 = pneg %p32
      %p39 = scmp.eq.s32.totalorder %s11, 1
      %p40 = por %p38, %p39
      %p41 = scmp.ne.s32.totalorder %s33, %s36
      %p42 = scmp.eq.s32.totalorder %s11, 0
      %p43 = por %p41, %p42
      %p44 = scmp.ne.s32.totalorder %s33, %s36
      %p45 = scmp.eq.s32.totalorder %s16, 1
      %p46 = por %p44, %p45
      %p47 = scmp.ne.s32.totalorder %s36, %s37
      %p48 = scmp.eq.s32.totalorder %s16, 0
      %p49 = por %p47, %p48
      %p50 = scmp.ne.s32.totalorder %s36, %s37
      %p51 = scmp.eq.s32.totalorder %s17, 1
      %p52 = por %p50, %p51
      %p54 = scmp.ne.s32.totalorder %s37, %s53
      %p55 = scmp.eq.s32.totalorder %s17, 0
      %p56 = por %p54, %p55
      %s57 = ssub.s32 %s18, %s30
      %s58 = ssub.s32 %s19, %s26
      %s59 = sor.u32 %s57, %s58
      %p60 = scmp.eq.s32.totalorder %s59, 0
      %s62 = sadd.s32 %s61, 1
      %s63 = scalar_select %p60, %s61, %s62
      %p66 = pneg %p60
      %p67 = scmp.eq.s32.totalorder %s11, 1
      %p68 = por %p66, %p67
      %p69 = scmp.ne.s32.totalorder %s61, %s64
      %p70 = scmp.eq.s32.totalorder %s11, 0
      %p71 = por %p69, %p70
      %p72 = scmp.ne.s32.totalorder %s61, %s64
      %p73 = scmp.eq.s32.totalorder %s16, 1
      %p74 = por %p72, %p73
      %p75 = scmp.ne.s32.totalorder %s64, %s65
      %p76 = scmp.eq.s32.totalorder %s16, 0
      %p77 = por %p75, %p76
      %p78 = scmp.ne.s32.totalorder %s64, %s65
      %p79 = scmp.eq.s32.totalorder %s17, 1
      %p80 = por %p78, %p79
      %p82 = scmp.ne.s32.totalorder %s65, %s81
      %p83 = scmp.eq.s32.totalorder %s17, 0
      %p84 = por %p82, %p83
      %s85 = ssub.s32 %s18, %s30
      %s86 = ssub.s32 %s19, %s26
      %s87 = sor.u32 %s85, %s86
      %p88 = scmp.eq.s32.totalorder %s87, 0
      %s90 = sadd.s32 %s89, 1
      %s91 = scalar_select %p88, %s89, %s90
      %p94 = pneg %p88
      %p95 = scmp.eq.s32.totalorder %s11, 1
      %p96 = por %p94, %p95
      %p97 = scmp.ne.s32.totalorder %s89, %s92
      %p98 = scmp.eq.s32.totalorder %s11, 0
      %p99 = por %p97, %p98
      %p100 = scmp.ne.s32.totalorder %s89, %s92
      %p101 = scmp.eq.s32.totalorder %s16, 1
      %p102 = por %p100, %p101
      %p103 = scmp.ne.s32.totalorder %s92, %s93
      %p104 = scmp.eq.s32.totalorder %s16, 0
      %p105 = por %p103, %p104
      %p106 = scmp.ne.s32.totalorder %s92, %s93
      %p107 = scmp.eq.s32.totalorder %s17, 1
      %p108 = por %p106, %p107
      %p110 = scmp.ne.s32.totalorder %s93, %s109
      %p111 = scmp.eq.s32.totalorder %s17, 0
      %p112 = por %p110, %p111
      %p113 = scmp.le.s32.totalorder 1, %s11
      %p114 = scmp.lt.s32.totalorder %s11, 3
      %p115 = pnand %p113, %p114
      %p116 = pneg %p115
      // Predicated region
      $region9: #{tpu_custom_call.1} parent=5 // pred_check
        _
      $region10: #{tpu_custom_call.1} parent=5 // pred_check_branch
        %118 = sbr.rel (%p115) target = $region12
      $region11: #{tpu_custom_call.1} parent=5 // pred_region
        %s119 = ssub.s32 %s11, 1
      $region12: #{tpu_custom_call.1} parent=5 // pred_fallthru
        _
      %p120 = scmp.lt.s32.totalorder %s11, 2
      // Predicated region
      $region13: #{tpu_custom_call.1} parent=5 // pred_check
        %p121 = pneg %p120
      $region14: #{tpu_custom_call.1} parent=5 // pred_check_branch
        %123 = sbr.rel (%p121) target = $region16
      $region15: #{tpu_custom_call.1} parent=5 // pred_region
        // Predicated region
        $region17: #{tpu_custom_call.1} parent=15 // pred_check
          %p124 = pneg %p43
        $region18: #{tpu_custom_call.1} parent=15 // pred_check_branch
          %126 = sbr.rel (%p124) target = $region20
        $region19: #{tpu_custom_call.1} parent=15 // pred_region
          %p127 = scmp.lt.s32.totalorder %s18, 1
          %s128 = scalar_select %p127, %s18, 1
          %s129 = smul.addr %s128, 8
          %s130 = smul.addr %s129, 8
          %s131 = scalar_lea.vmem %s0, %s130
        $region20: #{tpu_custom_call.1} parent=15 // pred_fallthru
          _
        // Predicated region
        $region21: #{tpu_custom_call.1} parent=15 // pred_check
          %p132 = pneg %p71
        $region22: #{tpu_custom_call.1} parent=15 // pred_check_branch
          %134 = sbr.rel (%p132) target = $region24
        $region23: #{tpu_custom_call.1} parent=15 // pred_region
          %s135 = smul.u32 2, %s19
          %p136 = scmp.lt.s32.totalorder %s18, 1
          %s137 = scalar_select %p136, %s18, 1
          %p138 = scmp.lt.s32.totalorder %s135, 1
          %s139 = scalar_select %p138, %s135, 1
          %s140 = smul.addr %s137, 2
          %s141 = sadd.s32 %s139, %s140
          %s142 = smul.addr %s141, 2
          %s143 = scalar_lea.vmem %s1, %s142
          %s144 = smul.u32 2, %s19
        $region24: #{tpu_custom_call.1} parent=15 // pred_fallthru
          _
      $region16: #{tpu_custom_call.1} parent=5 // pred_fallthru
        _
      %p145 = scmp.le.s32.totalorder 1, %s11
      %p146 = scmp.lt.s32.totalorder %s11, 3
      %p147 = pnand %p145, %p146
      %p148 = pneg %p147
      // Predicated region
      $region25: #{tpu_custom_call.1} parent=5 // pred_check
        _
      $region26: #{tpu_custom_call.1} parent=5 // pred_check_branch
        %150 = sbr.rel (%p147) target = $region28
      $region27: #{tpu_custom_call.1} parent=5 // pred_region
        %s151 = ssub.s32 %s11, 1
        %p152 = scmp.lt.s32.totalorder %s20, 1
        %s153 = scalar_select %p152, %s20, 1
        %s154 = smul.addr %s153, 8
        %s155 = smul.addr %s154, 8
        %s156 = scalar_lea.vmem %s0, %s155
        %p157 = pneg %p49
        %p158 = pneg %p46
        %s159 = smul.u32 2, %s21
        %p160 = scmp.lt.s32.totalorder %s20, 1
        %s161 = scalar_select %p160, %s20, 1
        %p162 = scmp.lt.s32.totalorder %s159, 1
        %s163 = scalar_select %p162, %s159, 1
        %s164 = smul.addr %s161, 2
        %s165 = sadd.s32 %s163, %s164
        %s166 = smul.addr %s165, 2
        %s167 = scalar_lea.vmem %s1, %s166
        %p168 = pneg %p77
        %p169 = pneg %p74
        %p170 = pneg %p105
        %p171 = pneg %p102
        %s172 = sand.u32 %s92, 1
        %s173 = scalar_lea.sflag [#allocation3], %s172
        %s174 = sand.u32 %s92, 1
        %s175 = smul.addr %s174, 8
        %s176 = scalar_lea.vmem [#allocation2], %s175
        %p177 = scmp.lt.s32.totalorder %s20, 1
        %s178 = scalar_select %p177, %s20, 1
        %s179 = smul.addr %s178, 8
        %s180 = smul.addr %s179, 8
        %s181 = scalar_lea.vmem %s0, %s180
        %s182 = smul.u32 2, %s21
        %p183 = scmp.lt.s32.totalorder %s20, 1
        %s184 = scalar_select %p183, %s20, 1
        %p185 = scmp.lt.s32.totalorder %s182, 1
        %s186 = scalar_select %p185, %s182, 1
        %s187 = smul.addr %s184, 2
        %s188 = sadd.s32 %s186, %s187
        %s189 = smul.addr %s188, 2
        %s190 = scalar_lea.vmem %s1, %s189
        %s191 = smul.u32 2, %s21
        %s192 = smul.u32 2, %s21
        %v193 = vld [vmem:[%s190] ss:$2 sm:$0x3]
        %v194 = vmax.f32 %v193, 0.0
        %v195 = vmin.f32 %v194, 15.0
        %s196 = scalar_lea.vmem %s190, 1
        %v197 = vld [vmem:[%s196] ss:$2 sm:$0x3]
        %v198 = vmax.f32 %v197, 0.0
        %v199 = vmin.f32 %v198, 15.0
        %v200 = vfloor.f32 %v195
        %v201 = vfloor.f32 %v199
        %v202 = vsub.f32 %v195, %v200
        %v203 = vsub.f32 %v199, %v201
        %v204 = vcvt.f32.s32.to.zero.pseudo %v200
        %v205 = vcvt.f32.s32.to.zero.pseudo %v201
        %v206 = vadd.s32 %v204, 1
        %vm207 = vcmp.lt.s32.totalorder %v206, 15
        %v208 = vsel %vm207, %v206, 15
        %v209 = vadd.s32 %v205, 1
        %vm210 = vcmp.lt.s32.totalorder %v209, 15
        %v211 = vsel %vm210, %v209, 15
        %v212 = vlaneseq
        %v213 = vshrl.u32 %v212, 7
        %v214 = vadd.s32 %v213, 8
        %v215 = vlaneseq
        %v216 = vshrl.u32 %v215, 7
        %v217 = vsub.s32 0, %v216
        %v218 = vrot.slane %v204, %v217
        %v219 = vlaneseq
        %v220 = vshrl.u32 %v219, 7
        %v221 = vsub.s32 1, %v220
        %v222 = vrot.slane %v204, %v221
        %vm223 = vcmp.eq.s32.totalorder %v213, %v218
        %vm224 = vcmp.eq.s32.totalorder %v213, %v222
        %vm225 = vcmp.eq.s32.totalorder %v214, %v218
        %vm226 = vcmp.eq.s32.totalorder %v214, %v222
        %v227 = vsel %vm223, 1, 0
        %v228 = vsel %vm224, 1, 0
        %v229 = vsel %vm225, 1, 0
        %v230 = vsel %vm226, 1, 0
        %v231 = vcvt.s32.f32 %v227
        %v232 = vcvt.s32.f32 %v228
        %v233 = vcvt.s32.f32 %v229
        %v234 = vcvt.s32.f32 %v230
        %v235 = vsub.f32 1.0, %v202
        %v237 = vlaneseq
        %v238 = vshrl.u32 %v237, 7
        %v239 = vsub.s32 0, %v238
        %v240 = vrot.slane %v235, %v239
        %v241 = vlaneseq
        %v242 = vshrl.u32 %v241, 7
        %v243 = vsub.s32 1, %v242
        %v244 = vrot.slane %v235, %v243
        %v247 = vmul.f32 %v231, %v240
        %v248 = vmul.f32 %v232, %v244
        %v249 = vmul.f32 %v233, %v240
        %v250 = vmul.f32 %v234, %v244
        %v251 = vlaneseq
        %v252 = vshrl.u32 %v251, 7
        %v253 = vsub.s32 0, %v252
        %v254 = vrot.slane %v208, %v253
        %v255 = vlaneseq
        %v256 = vshrl.u32 %v255, 7
        %v257 = vsub.s32 1, %v256
        %v258 = vrot.slane %v208, %v257
        %vm259 = vcmp.eq.s32.totalorder %v213, %v254
        %vm260 = vcmp.eq.s32.totalorder %v213, %v258
        %vm261 = vcmp.eq.s32.totalorder %v214, %v254
        %vm262 = vcmp.eq.s32.totalorder %v214, %v258
        %v263 = vsel %vm259, 1, 0
        %v264 = vsel %vm260, 1, 0
        %v265 = vsel %vm261, 1, 0
        %v266 = vsel %vm262, 1, 0
        %v267 = vcvt.s32.f32 %v263
        %v268 = vcvt.s32.f32 %v264
        %v269 = vcvt.s32.f32 %v265
        %v270 = vcvt.s32.f32 %v266
        %v272 = vlaneseq
        %v273 = vshrl.u32 %v272, 7
        %v274 = vsub.s32 0, %v273
        %v275 = vrot.slane %v202, %v274
        %v276 = vlaneseq
        %v277 = vshrl.u32 %v276, 7
        %v278 = vsub.s32 1, %v277
        %v279 = vrot.slane %v202, %v278
        %v282 = vmul.f32 %v267, %v275
        %v283 = vmul.f32 %v268, %v279
        %v284 = vmul.f32 %v269, %v275
        %v285 = vmul.f32 %v270, %v279
        %v286 = vadd.f32 %v247, %v282
        %v287 = vadd.f32 %v248, %v283
        %v288 = vadd.f32 %v249, %v284
        %v289 = vadd.f32 %v250, %v285
        %v290 = vlaneseq
        %v291 = vshrl.u32 %v290, 7
        %v292 = vsub.s32 0, %v291
        %v293 = vrot.slane %v205, %v292
        %v294 = vlaneseq
        %v295 = vshrl.u32 %v294, 7
        %v296 = vsub.s32 1, %v295
        %v297 = vrot.slane %v205, %v296
        %vm298 = vcmp.eq.s32.totalorder %v213, %v293
        %vm299 = vcmp.eq.s32.totalorder %v213, %v297
        %vm300 = vcmp.eq.s32.totalorder %v214, %v293
        %vm301 = vcmp.eq.s32.totalorder %v214, %v297
        %v302 = vsel %vm298, 1, 0
        %v303 = vsel %vm299, 1, 0
        %v304 = vsel %vm300, 1, 0
        %v305 = vsel %vm301, 1, 0
        %v306 = vcvt.s32.f32 %v302
        %v307 = vcvt.s32.f32 %v303
        %v308 = vcvt.s32.f32 %v304
        %v309 = vcvt.s32.f32 %v305
        %v310 = vsub.f32 1.0, %v203
        %v312 = vlaneseq
        %v313 = vshrl.u32 %v312, 7
        %v314 = vsub.s32 0, %v313
        %v315 = vrot.slane %v310, %v314
        %v316 = vlaneseq
        %v317 = vshrl.u32 %v316, 7
        %v318 = vsub.s32 1, %v317
        %v319 = vrot.slane %v310, %v318
        %v322 = vmul.f32 %v306, %v315
        %v323 = vmul.f32 %v307, %v319
        %v324 = vmul.f32 %v308, %v315
        %v325 = vmul.f32 %v309, %v319
        %v326 = vlaneseq
        %v327 = vshrl.u32 %v326, 7
        %v328 = vsub.s32 0, %v327
        %v329 = vrot.slane %v211, %v328
        %v330 = vlaneseq
        %v331 = vshrl.u32 %v330, 7
        %v332 = vsub.s32 1, %v331
        %v333 = vrot.slane %v211, %v332
        %vm334 = vcmp.eq.s32.totalorder %v213, %v329
        %vm335 = vcmp.eq.s32.totalorder %v213, %v333
        %vm336 = vcmp.eq.s32.totalorder %v214, %v329
        %vm337 = vcmp.eq.s32.totalorder %v214, %v333
        %v338 = vsel %vm334, 1, 0
        %v339 = vsel %vm335, 1, 0
        %v340 = vsel %vm336, 1, 0
        %v341 = vsel %vm337, 1, 0
        %v342 = vcvt.s32.f32 %v338
        %v343 = vcvt.s32.f32 %v339
        %v344 = vcvt.s32.f32 %v340
        %v345 = vcvt.s32.f32 %v341
        %v347 = vlaneseq
        %v348 = vshrl.u32 %v347, 7
        %v349 = vsub.s32 0, %v348
        %v350 = vrot.slane %v203, %v349
        %v351 = vlaneseq
        %v352 = vshrl.u32 %v351, 7
        %v353 = vsub.s32 1, %v352
        %v354 = vrot.slane %v203, %v353
        %v357 = vmul.f32 %v342, %v350
        %v358 = vmul.f32 %v343, %v354
        %v359 = vmul.f32 %v344, %v350
        %v360 = vmul.f32 %v345, %v354
        %v361 = vadd.f32 %v322, %v357
        %v362 = vadd.f32 %v323, %v358
        %v363 = vadd.f32 %v324, %v359
        %v364 = vadd.f32 %v325, %v360
        %v365 = vld [vmem:[%s181] sm:$0xff]
        %v366 = vld [vmem:[%s181 + $0x8] sm:$0xff]
        %v367 = vld [vmem:[%s181 + $0x10] sm:$0xff]
        %v368 = vld [vmem:[%s181 + $0x18] sm:$0xff]
        %v369 = vld [vmem:[%s181 + $0x20] sm:$0xff]
        %v370 = vld [vmem:[%s181 + $0x28] sm:$0xff]
        %v371 = vld [vmem:[%s181 + $0x30] sm:$0xff]
        %v372 = vld [vmem:[%s181 + $0x38] sm:$0xff]
        %vm373 = vcmask 130048
        %v375 = vsel %vm373, %v365, 0
        %v378 = vsel %vm373, %v366, 0
        %v381 = vsel %vm373, %v367, 0
        %v384 = vsel %vm373, %v368, 0
        %v387 = vsel %vm373, %v369, 0
        %v390 = vsel %vm373, %v370, 0
        %v393 = vsel %vm373, %v371, 0
        %v396 = vsel %vm373, %v372, 0
        %398 = vmatprep.subr.mxu0 0.0
        %399 = vmatpush1.msra.mxu0 0.0
        %400 = vmatprep.subr.mxu0 0.0
        %401 = vmatpush1.msra.mxu0 0.0
        %402 = vmatprep.subr.mxu0 0.0
        %403 = vmatpush1.msra.mxu0 0.0
        %404 = vmatprep.subr.mxu0 0.0
        %405 = vmatpush1.msra.mxu0 0.0
        %406 = vmatprep.subr.mxu0 0.0
        %407 = vmatpush1.msra.mxu0 0.0
        %408 = vmatprep.subr.mxu0 0.0
        %409 = vmatpush1.msra.mxu0 0.0
        %410 = vmatprep.subr.mxu0 0.0
        %411 = vmatpush1.msra.mxu0 0.0
        %412 = vmatprep.subr.mxu0 0.0
        %413 = vmatpush1.msra.mxu0 0.0
        %414 = vmatprep.subr.mxu0 0.0
        %415 = vmatpush1.msra.mxu0 0.0
        %416 = vmatprep.subr.mxu0 0.0
        %417 = vmatpush1.msra.mxu0 0.0
        %418 = vmatprep.subr.mxu0 0.0
        %419 = vmatpush1.msra.mxu0 0.0
        %420 = vmatprep.subr.mxu0 0.0
        %421 = vmatpush1.msra.mxu0 0.0
        %422 = vmatprep.subr.mxu0 0.0
        %423 = vmatpush1.msra.mxu0 0.0
        %424 = vmatprep.subr.mxu0 0.0
        %425 = vmatpush1.msra.mxu0 0.0
        %426 = vmatprep.subr.mxu0 %v364
        %427 = vmatpush1.msra.mxu0 %v363
        %428 = vmatprep.subr.mxu0 %v362
        %429 = vmatpush1.msra.mxu0 %v361
        %430 = vmatprep.subr.mxu0 0.0
        %431 = vmatpush2.msra.mxu0 0.0
        %432 = vmatprep.subr.mxu0 0.0
        %433 = vmatpush2.msra.mxu0 0.0
        %434 = vmatprep.subr.mxu0 0.0
        %435 = vmatpush2.msra.mxu0 0.0
        %436 = vmatprep.subr.mxu0 0.0
        %437 = vmatpush2.msra.mxu0 0.0
        %438 = vmatprep.subr.mxu0 0.0
        %439 = vmatpush2.msra.mxu0 0.0
        %440 = vmatprep.subr.mxu0 0.0
        %441 = vmatpush2.msra.mxu0 0.0
        %442 = vmatprep.subr.mxu0 0.0
        %443 = vmatpush2.msra.mxu0 0.0
        %444 = vmatprep.subr.mxu0 0.0
        %445 = vmatpush2.msra.mxu0 0.0
        %446 = vmatprep.subr.mxu0 0.0
        %447 = vmatpush2.msra.mxu0 0.0
        %448 = vmatprep.subr.mxu0 0.0
        %449 = vmatpush2.msra.mxu0 0.0
        %450 = vmatprep.subr.mxu0 0.0
        %451 = vmatpush2.msra.mxu0 0.0
        %452 = vmatprep.subr.mxu0 0.0
        %453 = vmatpush2.msra.mxu0 0.0
        %454 = vmatprep.subr.mxu0 0.0
        %455 = vmatpush2.msra.mxu0 0.0
        %456 = vmatprep.subr.mxu0 0.0
        %457 = vmatpush2.msra.mxu0 0.0
        %458 = vmatprep.subr.mxu0 0.0
        %459 = vmatpush2.msra.mxu0 0.0
        %460 = vmatprep.subr.mxu0 0.0
        %461 = vmatpush2.msra.mxu0 0.0
        %462 = vmatprep.mubr.f32.mxu0 0.0
        %463 = vmatmul.mubr.f32.gmra.mxu0 %v375
        %v464 = vpop.f32.mrf.mxu0
        %v465 = vadd.f32 0.0, %v464
        %v466 = vpop.f32.mrf.mxu0
        %v467 = vadd.f32 0.0, %v466
        %468 = vmatprep.mubr.f32.mxu0 0.0
        %469 = vmatmul.mubr.f32.gmra.mxu0 %v378
        %v470 = vpop.f32.mrf.mxu0
        %v471 = vadd.f32 0.0, %v470
        %v472 = vpop.f32.mrf.mxu0
        %v473 = vadd.f32 0.0, %v472
        %474 = vmatprep.mubr.f32.mxu0 0.0
        %475 = vmatmul.mubr.f32.gmra.mxu0 %v381
        %v476 = vpop.f32.mrf.mxu0
        %v477 = vadd.f32 0.0, %v476
        %v478 = vpop.f32.mrf.mxu0
        %v479 = vadd.f32 0.0, %v478
        %480 = vmatprep.mubr.f32.mxu0 0.0
        %481 = vmatmul.mubr.f32.gmra.mxu0 %v384
        %v482 = vpop.f32.mrf.mxu0
        %v483 = vadd.f32 0.0, %v482
        %v484 = vpop.f32.mrf.mxu0
        %v485 = vadd.f32 0.0, %v484
        %486 = vmatprep.mubr.f32.mxu0 0.0
        %487 = vmatmul.mubr.f32.gmra.mxu0 %v387
        %v488 = vpop.f32.mrf.mxu0
        %v489 = vadd.f32 0.0, %v488
        %v490 = vpop.f32.mrf.mxu0
        %v491 = vadd.f32 0.0, %v490
        %492 = vmatprep.mubr.f32.mxu0 0.0
        %493 = vmatmul.mubr.f32.gmra.mxu0 %v390
        %v494 = vpop.f32.mrf.mxu0
        %v495 = vadd.f32 0.0, %v494
        %v496 = vpop.f32.mrf.mxu0
        %v497 = vadd.f32 0.0, %v496
        %498 = vmatprep.mubr.f32.mxu0 0.0
        %499 = vmatmul.mubr.f32.gmra.mxu0 %v393
        %v500 = vpop.f32.mrf.mxu0
        %v501 = vadd.f32 0.0, %v500
        %v502 = vpop.f32.mrf.mxu0
        %v503 = vadd.f32 0.0, %v502
        %504 = vmatprep.mubr.f32.mxu0 0.0
        %505 = vmatmul.mubr.f32.gmra.mxu0 %v396
        %v506 = vpop.f32.mrf.mxu0
        %v507 = vadd.f32 0.0, %v506
        %v508 = vpop.f32.mrf.mxu0
        %v509 = vadd.f32 0.0, %v508
        %510 = vdwg.mxu0
        %v511 = vmul.f32 %v465, %v286
        %v512 = vmul.f32 %v467, %v287
        %v513 = vmul.f32 %v471, %v288
        %v514 = vmul.f32 %v473, %v289
        %v515 = vmul.f32 %v477, %v286
        %v516 = vmul.f32 %v479, %v287
        %v517 = vmul.f32 %v483, %v288
        %v518 = vmul.f32 %v485, %v289
        %v519 = vmul.f32 %v489, %v286
        %v520 = vmul.f32 %v491, %v287
        %v521 = vmul.f32 %v495, %v288
        %v522 = vmul.f32 %v497, %v289
        %v523 = vmul.f32 %v501, %v286
        %v524 = vmul.f32 %v503, %v287
        %v525 = vmul.f32 %v507, %v288
        %v526 = vmul.f32 %v509, %v289
        %v527 = vadd.f32 %v511, %v513
        %v528 = vrot.slane %v527, 4
        %v529 = vadd.f32 %v527, %v528
        %v530 = vrot.slane %v529, 2
        %v531 = vadd.f32 %v529, %v530
        %v532 = vrot.slane %v531, 1
        %v533 = vadd.f32 %v531, %v532
        %v534 = vadd.f32 %v512, %v514
        %v535 = vrot.slane %v534, 4
        %v536 = vadd.f32 %v534, %v535
        %v537 = vrot.slane %v536, 2
        %v538 = vadd.f32 %v536, %v537
        %v539 = vrot.slane %v538, 1
        %v540 = vadd.f32 %v538, %v539
        %v541 = vadd.f32 %v515, %v517
        %v542 = vrot.slane %v541, 4
        %v543 = vadd.f32 %v541, %v542
        %v544 = vrot.slane %v543, 2
        %v545 = vadd.f32 %v543, %v544
        %v546 = vrot.slane %v545, 1
        %v547 = vadd.f32 %v545, %v546
        %v548 = vadd.f32 %v516, %v518
        %v549 = vrot.slane %v548, 4
        %v550 = vadd.f32 %v548, %v549
        %v551 = vrot.slane %v550, 2
        %v552 = vadd.f32 %v550, %v551
        %v553 = vrot.slane %v552, 1
        %v554 = vadd.f32 %v552, %v553
        %v555 = vadd.f32 %v519, %v521
        %v556 = vrot.slane %v555, 4
        %v557 = vadd.f32 %v555, %v556
        %v558 = vrot.slane %v557, 2
        %v559 = vadd.f32 %v557, %v558
        %v560 = vrot.slane %v559, 1
        %v561 = vadd.f32 %v559, %v560
        %v562 = vadd.f32 %v520, %v522
        %v563 = vrot.slane %v562, 4
        %v564 = vadd.f32 %v562, %v563
        %v565 = vrot.slane %v564, 2
        %v566 = vadd.f32 %v564, %v565
        %v567 = vrot.slane %v566, 1
        %v568 = vadd.f32 %v566, %v567
        %v569 = vadd.f32 %v523, %v525
        %v570 = vrot.slane %v569, 4
        %v571 = vadd.f32 %v569, %v570
        %v572 = vrot.slane %v571, 2
        %v573 = vadd.f32 %v571, %v572
        %v574 = vrot.slane %v573, 1
        %v575 = vadd.f32 %v573, %v574
        %v576 = vadd.f32 %v524, %v526
        %v577 = vrot.slane %v576, 4
        %v578 = vadd.f32 %v576, %v577
        %v579 = vrot.slane %v578, 2
        %v580 = vadd.f32 %v578, %v579
        %v581 = vrot.slane %v580, 1
        %v582 = vadd.f32 %v580, %v581
        %v591 = vcombine.low %v533, %v540
        %v592 = vcombine.low %v547, %v554
        %v593 = vcombine.low %v561, %v568
        %v594 = vcombine.low %v575, %v582
        %v595 = vrot.slane %v592, 7
        %vm596 = vcmask 1041409
        %v597 = vsel %vm596, %v595, %v591
        %vm598 = vcmask 1045509
        %v599 = vsel %vm598, %v595, %v597
        %v600 = vrot.slane %v593, 6
        %vm601 = vcmask 1042434
        %v602 = vsel %vm601, %v600, %v599
        %vm603 = vcmask 1046534
        %v604 = vsel %vm603, %v600, %v602
        %v605 = vrot.slane %v594, 5
        %vm606 = vcmask 1043459
        %v607 = vsel %vm606, %v605, %v604
        %vm608 = vcmask 1047559
        %v609 = vsel %vm608, %v605, %v607
        %611 = vst [vmem:[%s176] sm:$0xff] %v609
        %s612 = sand.u32 %s92, 1
        %s613 = scalar_lea.sflag [#allocation3], %s612
        %s614 = sand.u32 %s92, 1
        %s615 = smul.addr %s614, 8
        %s616 = scalar_lea.vmem [#allocation2], %s615
        // Predicated region
        $region29: #{tpu_custom_call.1} parent=27 // pred_check
          %p617 = pneg %p102
        $region30: #{tpu_custom_call.1} parent=27 // pred_check_branch
          %619 = sbr.rel (%p617) target = $region32
        $region31: #{tpu_custom_call.1} parent=27 // pred_region
          %s620 = smul.u32 2, %s21
          %s622 = ssub.s32 128, 128
          %623 = vsyncadd %s613, %s622
          %s624 = smul.addr %s20, 2
          %s625 = sadd.s32 %s620, %s624
          %s626 = smul.addr %s625, 64
          %s627 = scalar_lea.hbm %s2, %s626
          %s629 = sshll.u32 %s616, 4
          %s630 = int_to_ptr.vmem [resolvable:$true] %s629
          %632 = dma.vmem_to_hbm [thread:$0]  %s630, 128, %s627, %s613
        $region32: #{tpu_custom_call.1} parent=27 // pred_fallthru
          _
      $region28: #{tpu_custom_call.1} parent=5 // pred_fallthru
        _
      %p633 = scmp.le.s32.totalorder 2, %s11
      // Predicated region
      $region33: #{tpu_custom_call.1} parent=5 // pred_check
        %p634 = pneg %p633
      $region34: #{tpu_custom_call.1} parent=5 // pred_check_branch
        %636 = sbr.rel (%p634) target = $region36
      $region35: #{tpu_custom_call.1} parent=5 // pred_region
        %s637 = ssub.s32 %s11, 2
        // Predicated region
        $region37: #{tpu_custom_call.1} parent=35 // pred_check
          %p638 = pneg %p108
        $region38: #{tpu_custom_call.1} parent=35 // pred_check_branch
          %640 = sbr.rel (%p638) target = $region40
        $region39: #{tpu_custom_call.1} parent=35 // pred_region
          %s641 = sand.u32 %s93, 1
          %s642 = scalar_lea.sflag [#allocation3], %s641
          %s643 = sand.u32 %s93, 1
          %s644 = smul.addr %s643, 8
          %s645 = scalar_lea.vmem [#allocation2], %s644
          %646 = dma.done %s642, 128
        $region40: #{tpu_custom_call.1} parent=35 // pred_fallthru
          _
      $region36: #{tpu_custom_call.1} parent=5 // pred_fallthru
        _
    $region6: #{tpu_custom_call.1} parent=1 // loop_footer
      %s15 = sadd.s32 1, %s11
    $region7: #{tpu_custom_call.1} parent=1 // loop_footer_branch
      %10 = sbr.rel target = $region3
    $region8: #{tpu_custom_call.1} parent=1 // loop_exit
      _
    %647 = vsyncpa [#allocation3], 1
    %s648 = scalar_lea.sflag [#allocation3], 1
    %649 = vsyncpa %s648, 1

</llo_original>
